<compile_context>
chip_gen: v7x
topology: tpu7x:2x2x1
jax: 0.10.0
libtpu: 0.0.40
codegen_flags: <defaults>
</compile_context>

<pallas_src>
import jax
import jax.numpy as jnp
from jax.experimental import pallas as pl
from jax.experimental.pallas import tpu as pltpu


def _round_up(x, m):
    return ((x + m - 1) // m) * m


def _isomax_kernel(k_ref, feat_ref, protoT_ref, pn2_ref, out_ref, fn_ref, fn2_ref):
    # k_ref:      (1,)          SMEM, pre-folded  -|distance_scale| / temperature
    # feat_ref:   (bm, F_pad)   VMEM feature tile (constant across the class axis)
    # protoT_ref: (F_pad, bc)   VMEM (-2 * normalized prototypes)^T
    # pn2_ref:    (1, bc)       VMEM squared norms of normalized prototypes (1 or 0)
    # out_ref:    (bm, bc)      VMEM logits tile
    # fn_ref:     (bm, F_pad)   VMEM scratch: normalized features (MXU dtype)
    # fn2_ref:    (bm, 1)       VMEM scratch: ||fn||^2 per row

    # Normalize the feature tile only when it changes (first class tile).
    @pl.when(pl.program_id(1) == 0)
    def _():
        eps = 1e-12
        f = feat_ref[...].astype(jnp.float32)
        s = jnp.sum(f * f, axis=-1, keepdims=True)           # (bm, 1)
        inv = jax.lax.rsqrt(jnp.maximum(s, eps * eps))        # == 1 / max(||f||, eps)
        fn_ref[...] = (f * inv).astype(fn_ref.dtype)
        fn2_ref[...] = s * (inv * inv)                        # 1.0 (or 0.0 for zero rows)

    # MXU cross term; the -2 already rides the prototype operand.
    # TODO(synk): pass precision=jax.lax.Precision.HIGHEST if bit-exact f32 cdist
    # is required near distance == 0 (cancellation in the expanded form).
    dots = jnp.dot(fn_ref[...], protoT_ref[...],
                   preferred_element_type=jnp.float32)        # (bm, bc) = -2 fn.pn

    # ||a-b||^2 = ||a||^2 + ||b||^2 - 2 a.b   (clamped at 0 for fp safety)
    d2 = jnp.maximum(fn2_ref[...] + pn2_ref[...] + dots, 0.0)
    out_ref[...] = (k_ref[0] * jnp.sqrt(d2)).astype(out_ref.dtype)


def isomax_plus_first_part(features, prototypes, distance_scale,
                           temperature=1.0, block_m=None, block_c=256):
    """features: (N, F), prototypes: (C, F), distance_scale: (1,) -> (N, C)."""
    N, F = features.shape
    C, F2 = prototypes.shape
    assert F == F2
    assert distance_scale.size == 1
    eps = 1e-12
    out_dtype = features.dtype

    bf16_in = (features.dtype == jnp.bfloat16
               and prototypes.dtype == jnp.bfloat16)
    mxu_dtype = jnp.bfloat16 if bf16_in else jnp.float32
    mxu_bytes = 2 if bf16_in else 4
    feat_bytes = jnp.dtype(features.dtype).itemsize
    out_bytes = jnp.dtype(out_dtype).itemsize
    sub_m = 16 if out_dtype == jnp.bfloat16 else 8   # sublane pack of output rows

    # ---- one-time prototype prep (hoisted out of the kernel) ---------------
    p32 = prototypes.astype(jnp.float32)
    p_norm = jnp.sqrt(jnp.sum(p32 * p32, axis=-1, keepdims=True))
    pn = p32 / jnp.maximum(p_norm, eps)              # (C, F): unit (or zero) rows
    pn2 = jnp.sum(pn * pn, axis=-1)                  # (C,): 1.0, or 0.0 for zero rows

    # ---- pad to TPU-friendly shapes (zero pads change neither norms nor dots)
    F_pad = _round_up(F, 128)                        # dense MXU contraction tiles
    C_pad = _round_up(C, 128)                        # lane-dense output class dim
    N_pad = _round_up(max(N, sub_m), sub_m)

    # ---- tile-size selection -------------------------------------------------
    if block_m is None:
        block_m = 512 if bf16_in else 256            # bf16: clear v6e's HBM roofline
    bm = min(_round_up(block_m, sub_m), N_pad)

    # Keep the whole prototype operand resident when it is small: fetched from
    # HBM exactly once; only features / logits stream.
    if F_pad * C_pad * mxu_bytes <= (8 << 20):
        bc = C_pad
    else:
        bc = min(_round_up(block_c, 128), C_pad)

    def vmem_bytes(bm_, bc_):
        io = 2 * (bm_ * F_pad * feat_bytes           # feature tile  (double-buffered)
                  + F_pad * bc_ * mxu_bytes          # protoT tile
                  + bc_ * 4                          # pn2 tile
                  + bm_ * bc_ * out_bytes)           # output tile
        scratch = bm_ * F_pad * mxu_bytes + bm_ * 4  # persistent fn / fn2 scratch
        temps = bm_ * F_pad * 4 + bm_ * bc_ * 4      # in-kernel f32 temporaries
        return io + scratch + temps

    VMEM_BUDGET = 48 << 20                           # headroom for v7x's 64 MiB VMEM
    while vmem_bytes(bm, bc) > VMEM_BUDGET and bm > sub_m:
        bm = max(sub_m, _round_up(bm // 2, sub_m))
    while vmem_bytes(bm, bc) > VMEM_BUDGET and bc > 128:
        bc = max(128, _round_up(bc // 2, 128))

    N_pad = _round_up(N_pad, bm)
    C_pad = _round_up(C_pad, bc)

    # ---- pad operands ----------------------------------------------------------
    feats = features
    if F_pad != F:
        feats = jnp.pad(feats, ((0, 0), (0, F_pad - F)))
        pn = jnp.pad(pn, ((0, 0), (0, F_pad - F)))
    if N_pad != N:
        feats = jnp.pad(feats, ((0, N_pad - N), (0, 0)))
    if C_pad != C:
        pn = jnp.pad(pn, ((0, C_pad - C), (0, 0)))
        pn2 = jnp.pad(pn2, (0, C_pad - C))

    # -2 folded into the MXU operand (exact for unit rows: exponent-only change).
    protoT = (-2.0 * pn).T.astype(mxu_dtype)         # (F_pad, C_pad)
    pn2 = pn2.reshape(1, C_pad).astype(jnp.float32)  # (1, C_pad)

    # Fold the scalar once: logits = k * dist with k = -|scale| / temperature.
    k = (-jnp.abs(distance_scale.reshape(-1)[:1].astype(jnp.float32))
         / jnp.float32(temperature))

    grid = (N_pad // bm, C_pad // bc)
    flops = 2 * N_pad * C_pad * F_pad + 6 * N_pad * C_pad
    transcend = N_pad * C_pad + N_pad
    bytes_acc = (N_pad * F_pad * feat_bytes + F_pad * C_pad * mxu_bytes
                 + C_pad * 4 + N_pad * C_pad * out_bytes)

    out = pl.pallas_call(
        _isomax_kernel,
        out_shape=jax.ShapeDtypeStruct((N_pad, C_pad), out_dtype),
        grid_spec=pltpu.PrefetchScalarGridSpec(
            num_scalar_prefetch=0,
            grid=grid,
            in_specs=[
                # folded scalar lives in SMEM
                pl.BlockSpec(memory_space=pltpu.MemorySpace.SMEM),
                # feature tile: batch-tiled, constant across the class axis
                pl.BlockSpec((bm, F_pad), lambda i, j: (i, 0)),
                # pre-normalized, (-2)-scaled, pre-transposed prototype tile
                pl.BlockSpec((F_pad, bc), lambda i, j: (0, j)),
                # prototype squared norms (tiny row, per class tile)
                pl.BlockSpec((1, bc), lambda i, j: (0, j)),
            ],
            out_specs=pl.BlockSpec((bm, bc), lambda i, j: (i, j)),
            scratch_shapes=[
                pltpu.VMEM((bm, F_pad), mxu_dtype),   # normalized feature tile
                pltpu.VMEM((bm, 1), jnp.float32),     # ||fn||^2 per row
            ],
        ),
        compiler_params=pltpu.CompilerParams(
            # Class axis is 'arbitrary': the normalized-feature scratch written
            # at j==0 is reused across it; batch axis stays 'parallel' (megacore).
            dimension_semantics=("parallel", "arbitrary"),
            vmem_limit_bytes=int(min(max(vmem_bytes(bm, bc) + (4 << 20),
                                         32 << 20), 64 << 20)),
        ),
        cost_estimate=pl.CostEstimate(flops=int(flops),
                                      transcendentals=int(transcend),
                                      bytes_accessed=int(bytes_acc)),
    )(k, feats, protoT, pn2)

    # TODO(synk): if the consumer accepts the padded (N_pad, C_pad) layout, return
    # `out` directly and skip this extra XLA slice/copy of the logits.
    return out[:N, :C]


def _reference(features, prototypes, distance_scale, temperature=1.0):
    eps = 1e-12
    fn = features / jnp.maximum(
        jnp.linalg.norm(features, axis=-1, keepdims=True), eps)
    pn = prototypes / jnp.maximum(
        jnp.linalg.norm(prototypes, axis=-1, keepdims=True), eps)
    diff = fn[:, None, :] - pn[None, :, :]
    dist = jnp.sqrt(jnp.sum(diff * diff, axis=-1))
    return -(jnp.abs(distance_scale[0]) * dist) / temperature


if __name__ == "__main__":
    num_features = 32
    num_classes = 16
    batch = 8
    temperature = 1.0
    const_init = 0.0

    key = jax.random.PRNGKey(0)
    k_feat, k_proto = jax.random.split(key)

    # module __init__: prototypes ~ N(const_init, 0.01), distance_scale = 1.0
    prototypes = const_init + 0.01 * jax.random.normal(
        k_proto, (num_classes, num_features), dtype=jnp.float32)
    distance_scale = jnp.ones((1,), dtype=jnp.float32)

    features = jax.random.normal(k_feat, (batch, num_features),
                                 dtype=jnp.float32)

    logits = isomax_plus_first_part(features, prototypes, distance_scale,
                                    temperature=temperature)
    logits = jax.block_until_ready(logits)

    ref = _reference(features, prototypes, distance_scale, temperature)
    assert logits.shape == (batch, num_classes)
    assert jnp.allclose(logits, ref, atol=1e-5, rtol=1e-5), (
        f"max abs err = {jnp.max(jnp.abs(logits - ref))}")

    print("KERNEL_OK")
</pallas_src>

<mosaic_0001>
module attributes {stable_mosaic.version = 11 : i64} {
  func.func @_isomax_kernel(%arg0: i32, %arg1: i32, %arg2: memref<1xf32, #tpu.memory_space<smem>>, %arg3: memref<8x128xf32, #tpu.memory_space<vmem>>, %arg4: memref<128x128xf32, #tpu.memory_space<vmem>>, %arg5: memref<1x128xf32, #tpu.memory_space<vmem>>, %arg6: memref<8x128xf32, #tpu.memory_space<vmem>>, %arg7: memref<8x128xf32, #tpu.memory_space<vmem>>, %arg8: memref<8x1xf32, #tpu.memory_space<vmem>>) attributes {dimension_semantics = [#tpu.dimension_semantics<parallel>, #tpu.dimension_semantics<arbitrary>], iteration_bounds = array<i64: 1, 1>, scalar_prefetch = 0 : i64, scratch_operands = 2 : i64, tpu.core_type = #tpu.core_type<tc>, window_params = [{transform_indices = @transform_0, window_bounds = array<i64: 1>}, {transform_indices = @transform_1, window_bounds = array<i64: 8, 128>}, {transform_indices = @transform_2, window_bounds = array<i64: 128, 128>}, {transform_indices = @transform_3, window_bounds = array<i64: 1, 128>}, {transform_indices = @transform_4, window_bounds = array<i64: 8, 128>}]} {
    %c0_i32 = arith.constant 0 : i32
    %0 = arith.cmpi eq, %arg1, %c0_i32 : i32
    %1 = arith.extui %0 : i1 to i32
    %c0_i32_0 = arith.constant 0 : i32
    %2 = arith.cmpi ne, %1, %c0_i32_0 : i32
    scf.if %2 {
      %c0_12 = arith.constant 0 : index
      %c0_13 = arith.constant 0 : index
      %19 = vector.load %arg3[%c0_12, %c0_13] : memref<8x128xf32, #tpu.memory_space<vmem>>, vector<8x128xf32>
      %20 = arith.mulf %19, %19 : vector<8x128xf32>
      %cst_14 = arith.constant dense<0.000000e+00> : vector<8xf32>
      %21 = vector.multi_reduction <add>, %20, %cst_14 [1] : vector<8x128xf32> to vector<8xf32>
      %22 = vector.shape_cast %21 : vector<8xf32> to vector<8x1xf32>
      %cst_15 = arith.constant 1.000000e-24 : f32
      %23 = vector.broadcast %cst_15 : f32 to vector<8x1xf32>
      %24 = arith.maximumf %22, %23 : vector<8x1xf32>
      %25 = math.rsqrt %24 : vector<8x1xf32>
      %26 = vector.broadcast %25 : vector<8x1xf32> to vector<8x128xf32>
      %27 = arith.mulf %19, %26 : vector<8x128xf32>
      %c0_16 = arith.constant 0 : index
      %c0_17 = arith.constant 0 : index
      %28 = vector.load %arg7[%c0_16, %c0_17] : memref<8x128xf32, #tpu.memory_space<vmem>>, vector<8x128xf32>
      tpu.vector_store %arg7[%c0_16, %c0_17], %27 {strides = array<i32>} : memref<8x128xf32, #tpu.memory_space<vmem>>, vector<8x128xf32>,
      %29 = arith.mulf %25, %25 : vector<8x1xf32>
      %30 = arith.mulf %22, %29 : vector<8x1xf32>
      %c0_18 = arith.constant 0 : index
      %c0_19 = arith.constant 0 : index
      %31 = vector.load %arg8[%c0_18, %c0_19] : memref<8x1xf32, #tpu.memory_space<vmem>>, vector<8x1xf32>
      tpu.vector_store %arg8[%c0_18, %c0_19], %30 {strides = array<i32>} : memref<8x1xf32, #tpu.memory_space<vmem>>, vector<8x1xf32>,
    } else {
    }
    %c0 = arith.constant 0 : index
    %c0_1 = arith.constant 0 : index
    %3 = vector.load %arg7[%c0, %c0_1] : memref<8x128xf32, #tpu.memory_space<vmem>>, vector<8x128xf32>
    %c0_2 = arith.constant 0 : index
    %c0_3 = arith.constant 0 : index
    %4 = vector.load %arg4[%c0_2, %c0_3] : memref<128x128xf32, #tpu.memory_space<vmem>>, vector<128x128xf32>
    %cst = arith.constant dense<0.000000e+00> : vector<8x128xf32>
    %5 = tpu.matmul %3, %4, %cst {dimension_numbers = #tpu.dot_dimension_numbers<[1], [0], [0], [1], [0, 0, 1, 1], [], []>} : vector<8x128xf32>, vector<128x128xf32>, vector<8x128xf32> -> vector<8x128xf32>
    %c0_4 = arith.constant 0 : index
    %c0_5 = arith.constant 0 : index
    %6 = vector.load %arg8[%c0_4, %c0_5] : memref<8x1xf32, #tpu.memory_space<vmem>>, vector<8x1xf32>
    %c0_6 = arith.constant 0 : index
    %c0_7 = arith.constant 0 : index
    %7 = vector.load %arg5[%c0_6, %c0_7] : memref<1x128xf32, #tpu.memory_space<vmem>>, vector<1x128xf32>
    %8 = vector.broadcast %6 : vector<8x1xf32> to vector<8x128xf32>
    %9 = vector.broadcast %7 : vector<1x128xf32> to vector<8x128xf32>
    %10 = arith.addf %8, %9 : vector<8x128xf32>
    %11 = arith.addf %10, %5 : vector<8x128xf32>
    %cst_8 = arith.constant 0.000000e+00 : f32
    %12 = vector.broadcast %cst_8 : f32 to vector<8x128xf32>
    %13 = arith.maximumf %11, %12 : vector<8x128xf32>
    %c0_9 = arith.constant 0 : index
    %14 = memref.load %arg2[%c0_9] : memref<1xf32, #tpu.memory_space<smem>>
    %15 = math.sqrt %13 : vector<8x128xf32>
    %16 = vector.broadcast %14 : f32 to vector<8x128xf32>
    %17 = arith.mulf %16, %15 : vector<8x128xf32>
    %c0_10 = arith.constant 0 : index
    %c0_11 = arith.constant 0 : index
    %18 = vector.load %arg6[%c0_10, %c0_11] : memref<8x128xf32, #tpu.memory_space<vmem>>, vector<8x128xf32>
    tpu.vector_store %arg6[%c0_10, %c0_11], %17 {strides = array<i32>} : memref<8x128xf32, #tpu.memory_space<vmem>>, vector<8x128xf32>,
    return
  }
  func.func @transform_0(%arg0: i32, %arg1: i32) -> i32 {
    %c0_i32 = arith.constant 0 : i32
    %c0_i32_0 = arith.constant 0 : i32
    return %c0_i32 : i32
  }
  func.func @transform_1(%arg0: i32, %arg1: i32) -> (i32, i32) {
    %c0_i32 = arith.constant 0 : i32
    %c0_i32_0 = arith.constant 0 : i32
    return %arg0, %c0_i32 : i32, i32
  }
  func.func @transform_2(%arg0: i32, %arg1: i32) -> (i32, i32) {
    %c0_i32 = arith.constant 0 : i32
    %c0_i32_0 = arith.constant 0 : i32
    return %c0_i32, %arg1 : i32, i32
  }
  func.func @transform_3(%arg0: i32, %arg1: i32) -> (i32, i32) {
    %c0_i32 = arith.constant 0 : i32
    %c0_i32_0 = arith.constant 0 : i32
    return %c0_i32, %arg1 : i32, i32
  }
  func.func @transform_4(%arg0: i32, %arg1: i32) -> (i32, i32) {
    %c0_i32 = arith.constant 0 : i32
    return %arg0, %arg1 : i32, i32
  }
}

</mosaic_0001>

<llo_original>
// kernel: tpu_custom_call.1
$region0: #{tpu_custom_call.1}
  #allocation0 [shape = 'u32[]', space=smem, size = 0x4, offset = 0x4, fixed_abs, tag = 'smem constant byte address 0x4 - core index']
  #allocation1 [shape = 'u32[144,128]{1,0:T(1,128)}', space=vmem, size = 0x12000, scoped, tag = 'internal scratch']
  #allocation2 [shape = 'f32[8,128]{1,0:T(8,128)}', space=vmem, size = 0x1000, scoped, tag = 'scratch operand']
  #allocation3 [shape = 'f32[8,1]{1,0:T(8,128)}', space=vmem, size = 0x1000, scoped, tag = 'scratch operand']
  #allocation4 [shape = 'f32[1]{0:T(128)S(6)}', space=smem, size = 0x200, scoped, tag = 'scoped memory for tpu_custom_call.1']
  %s0 = inlined_call_operand.<no memory space> [shape: f32[1], index: 0, kind: input, shape index: {}]
  %s1 = inlined_call_operand.hbm [shape: f32[8,128], index: 1, kind: input, shape index: {}]
  %s2 = inlined_call_operand.hbm [shape: f32[128,128], index: 2, kind: input, shape index: {}]
  %s3 = inlined_call_operand.vmem [shape: f32[1,128], index: 3, kind: input, shape index: {}]
  %s4 = inlined_call_operand.hbm [shape: f32[8,128], index: 4, kind: output, shape index: {}]
  %s5 = sld [smem:[#allocation0]]
  $region38: #{tpu_custom_call.1} parent=0
    _
  %s7 = ssub.s32 1, %s5
  %s8 = scalar_select 0, %s7, %s5
  %9 = sst [smem:[#allocation4]] %s0
  $region1: #{tpu_custom_call.1} parent=0
    #allocation5 [shape = 'u8[4096]{0}', space=vmem, size = 0x1000, scoped, tag = 'input window, operand 1, single buffered']
    #allocation6 [shape = 's32[1]{0}', space=sflag, size = 0x4, scoped, tag = 'scoped memory for tpu_custom_call.1']
    #allocation7 [shape = 's32[1]{0}', space=sflag, size = 0x4, scoped, tag = 'scoped memory for tpu_custom_call.1']
    #allocation8 [shape = 'u8[65536]{0}', space=vmem, size = 0x10000, scoped, tag = 'input window, operand 2, single buffered']
    #allocation9 [shape = 's32[1]{0}', space=sflag, size = 0x4, scoped, tag = 'scoped memory for tpu_custom_call.1']
    #allocation10 [shape = 'u8[4096]{0}', space=vmem, size = 0x1000, scoped, tag = 'output window, operand 0, single buffered']
    %10 = vsyncpa [#allocation6], 0
    %11 = vsyncpa [#allocation9], 0
    %12 = vsyncpa [#allocation7], 0
    // Predicated region
    $region2: #{tpu_custom_call.1} parent=1 // pred_check
      _
    $region3: #{tpu_custom_call.1} parent=1 // pred_check_branch
      %14 = sbr.rel (0) target = $region5
    $region4: #{tpu_custom_call.1} parent=1 // pred_region
      _
    $region5: #{tpu_custom_call.1} parent=1 // pred_fallthru
      _
    // Predicated region
    $region6: #{tpu_custom_call.1} parent=1 // pred_check
      _
    $region7: #{tpu_custom_call.1} parent=1 // pred_check_branch
      %16 = sbr.rel (0) target = $region9
    $region8: #{tpu_custom_call.1} parent=1 // pred_region
      %s18 = ssub.s32 128, 128
      %19 = vsyncadd [#allocation6], %s18
      %s21 = sshll.u32 [#allocation5], 4
      %s22 = int_to_ptr.vmem [resolvable:$true] %s21
      %24 = dma.hbm_to_vmem [thread:$0]  %s1, 128, %s22, [#allocation6]
    $region9: #{tpu_custom_call.1} parent=1 // pred_fallthru
      _
    // Predicated region
    $region10: #{tpu_custom_call.1} parent=1 // pred_check
      _
    $region11: #{tpu_custom_call.1} parent=1 // pred_check_branch
      %26 = sbr.rel (0) target = $region13
    $region12: #{tpu_custom_call.1} parent=1 // pred_region
      %s28 = ssub.s32 2048, 2048
      %29 = vsyncadd [#allocation9], %s28
      %s30 = sshll.u32 [#allocation8], 4
      %s31 = int_to_ptr.vmem [resolvable:$true] %s30
      %36 = dma.hbm_to_vmem [thread:$0]  %s2, 2048, %s31, [#allocation9], 128, 128, 8
    $region13: #{tpu_custom_call.1} parent=1 // pred_fallthru
      _
    // Predicated region
    $region14: #{tpu_custom_call.1} parent=1 // pred_check
      _
    $region15: #{tpu_custom_call.1} parent=1 // pred_check_branch
      %38 = sbr.rel (0) target = $region17
    $region16: #{tpu_custom_call.1} parent=1 // pred_region
      _
    $region17: #{tpu_custom_call.1} parent=1 // pred_fallthru
      _
    // Predicated region
    $region18: #{tpu_custom_call.1} parent=1 // pred_check
      _
    $region19: #{tpu_custom_call.1} parent=1 // pred_check_branch
      %40 = sbr.rel (0) target = $region21
    $region20: #{tpu_custom_call.1} parent=1 // pred_region
      %41 = dma.done [#allocation6], 128
    $region21: #{tpu_custom_call.1} parent=1 // pred_fallthru
      _
    // Predicated region
    $region22: #{tpu_custom_call.1} parent=1 // pred_check
      _
    $region23: #{tpu_custom_call.1} parent=1 // pred_check_branch
      %43 = sbr.rel (0) target = $region25
    $region24: #{tpu_custom_call.1} parent=1 // pred_region
      %44 = dma.done [#allocation9], 2048
    $region25: #{tpu_custom_call.1} parent=1 // pred_fallthru
      _
    %p45 = scmp.eq.s32.totalorder 0, 0
    // Predicated region
    $region26: #{tpu_custom_call.1} parent=1 // pred_check
      %p46 = pneg %p45
    $region27: #{tpu_custom_call.1} parent=1 // pred_check_branch
      %48 = sbr.rel (%p46) target = $region29
    $region28: #{tpu_custom_call.1} parent=1 // pred_region
      %v49 = vld [vmem:[#allocation5] sm:$0xff]
      %v50 = vmul.f32 %v49, %v49
      %51 = vadd.xlane.f32.xlu0 %v50
      %v52 = vpop.xlane.xlu0 %51
      %v53 = vmax.f32 %v52, 1e-24
      %v54 = vrsqrt.pop %v53
      %v55 = vmul.f32 %v49, %v54
      %56 = vst [vmem:[#allocation2] sm:$0xff] %v55
      %v57 = vmul.f32 %v54, %v54
      %v58 = vmul.f32 %v52, %v57
      %vm59 = vcmask 7168
      %60 = vst.msk [vmem:[#allocation3] sm:$0xff] %vm59, %v58
    $region29: #{tpu_custom_call.1} parent=1 // pred_fallthru
      _
    %v61 = vld [vmem:[#allocation2] sm:$0xff]
    %v62 = vld [vmem:[#allocation8] sm:$0xff]
    %v63 = vld [vmem:[#allocation8 + $0x8] sm:$0xff]
    %v64 = vld [vmem:[#allocation8 + $0x10] sm:$0xff]
    %v65 = vld [vmem:[#allocation8 + $0x18] sm:$0xff]
    %v66 = vld [vmem:[#allocation8 + $0x20] sm:$0xff]
    %v67 = vld [vmem:[#allocation8 + $0x28] sm:$0xff]
    %v68 = vld [vmem:[#allocation8 + $0x30] sm:$0xff]
    %v69 = vld [vmem:[#allocation8 + $0x38] sm:$0xff]
    %v70 = vld [vmem:[#allocation8 + $0x40] sm:$0xff]
    %v71 = vld [vmem:[#allocation8 + $0x48] sm:$0xff]
    %v72 = vld [vmem:[#allocation8 + $0x50] sm:$0xff]
    %v73 = vld [vmem:[#allocation8 + $0x58] sm:$0xff]
    %v74 = vld [vmem:[#allocation8 + $0x60] sm:$0xff]
    %v75 = vld [vmem:[#allocation8 + $0x68] sm:$0xff]
    %v76 = vld [vmem:[#allocation8 + $0x70] sm:$0xff]
    %v77 = vld [vmem:[#allocation8 + $0x78] sm:$0xff]
    %78 = vmatprep.subr.mxu0 0.0
    %79 = vmatpush1.msra.mxu0 %v62
    %80 = vmatprep.subr.mxu0 0.0
    %81 = vmatpush1.msra.mxu0 %v63
    %82 = vmatprep.subr.mxu0 0.0
    %83 = vmatpush1.msra.mxu0 %v64
    %84 = vmatprep.subr.mxu0 0.0
    %85 = vmatpush1.msra.mxu0 %v65
    %86 = vmatprep.subr.mxu0 0.0
    %87 = vmatpush1.msra.mxu0 %v66
    %88 = vmatprep.subr.mxu0 0.0
    %89 = vmatpush1.msra.mxu0 %v67
    %90 = vmatprep.subr.mxu0 0.0
    %91 = vmatpush1.msra.mxu0 %v68
    %92 = vmatprep.subr.mxu0 0.0
    %93 = vmatpush1.msra.mxu0 %v69
    %94 = vmatprep.subr.mxu0 0.0
    %95 = vmatpush1.msra.mxu0 %v70
    %96 = vmatprep.subr.mxu0 0.0
    %97 = vmatpush1.msra.mxu0 %v71
    %98 = vmatprep.subr.mxu0 0.0
    %99 = vmatpush1.msra.mxu0 %v72
    %100 = vmatprep.subr.mxu0 0.0
    %101 = vmatpush1.msra.mxu0 %v73
    %102 = vmatprep.subr.mxu0 0.0
    %103 = vmatpush1.msra.mxu0 %v74
    %104 = vmatprep.subr.mxu0 0.0
    %105 = vmatpush1.msra.mxu0 %v75
    %106 = vmatprep.subr.mxu0 0.0
    %107 = vmatpush1.msra.mxu0 %v76
    %108 = vmatprep.subr.mxu0 0.0
    %109 = vmatpush1.msra.mxu0 %v77
    %110 = vmatprep.subr.mxu0 0.0
    %111 = vmatpush1.msra.mxu0 0.0
    %112 = vmatprep.subr.mxu0 0.0
    %113 = vmatpush1.msra.mxu0 0.0
    %114 = vmatprep.subr.mxu0 0.0
    %115 = vmatpush1.msra.mxu0 0.0
    %116 = vmatprep.subr.mxu0 0.0
    %117 = vmatpush1.msra.mxu0 0.0
    %118 = vmatprep.subr.mxu0 0.0
    %119 = vmatpush1.msra.mxu0 0.0
    %120 = vmatprep.subr.mxu0 0.0
    %121 = vmatpush1.msra.mxu0 0.0
    %122 = vmatprep.subr.mxu0 0.0
    %123 = vmatpush1.msra.mxu0 0.0
    %124 = vmatprep.subr.mxu0 0.0
    %125 = vmatpush1.msra.mxu0 0.0
    %126 = vmatprep.subr.mxu0 0.0
    %127 = vmatpush1.msra.mxu0 0.0
    %128 = vmatprep.subr.mxu0 0.0
    %129 = vmatpush1.msra.mxu0 0.0
    %130 = vmatprep.subr.mxu0 0.0
    %131 = vmatpush1.msra.mxu0 0.0
    %132 = vmatprep.subr.mxu0 0.0
    %133 = vmatpush1.msra.mxu0 0.0
    %134 = vmatprep.subr.mxu0 0.0
    %135 = vmatpush1.msra.mxu0 0.0
    %136 = vmatprep.subr.mxu0 0.0
    %137 = vmatpush1.msra.mxu0 0.0
    %138 = vmatprep.subr.mxu0 0.0
    %139 = vmatpush1.msra.mxu0 0.0
    %140 = vmatprep.subr.mxu0 0.0
    %141 = vmatpush1.msra.mxu0 0.0
    %142 = vmatprep.mubr.f32.mxu0 0.0
    %143 = vmatmul.mubr.f32.gmra.mrb[0].mxu0 %v61
    %v144 = vpop.f32.mrb[0].mxu0
    %v145 = vadd.f32 0.0, %v144
    %v146 = vpop.f32.mrb[0].mxu0
    %147 = vdwg.mxu0
    %v148 = vld [vmem:[#allocation3] sm:$0xff]
    %v149 = vld [vmem:[%s3] sm:$0x1]
    %151 = vset.pattern.permute.xlu0 0
    %152 = vperm.xlu0 %151, %v148
    %v153 = vpop.permute.xlu0 %152
    %v156 = vlaneseq
    %v157 = vshrl.u32 %v156, 7
    %v158 = vsub.s32 0, %v157
    %v159 = vrot.slane %v149, %v158
    %v161 = vadd.f32 %v153, %v159
    %v162 = vadd.f32 %v161, %v145
    %v163 = vmax.f32 %v162, 0.0
    %s164 = sld [smem:[#allocation4]]
    %v165 = vrsqrt.pop %v163
    %v166 = vmul.f32 %v163, %v165
    %vm167 = vcmp.eq.f32.partialorder %v163, inf
    %v168 = vsel %vm167, %v163, %v166
    %vm169 = vcmp.eq.f32.partialorder %v163, 0.0
    %v170 = vand.u32 %v163, 2147483648
    %v171 = vsel %vm169, %v170, %v168
    %v172 = vstv %s164
    %v173 = vmul.f32 %v172, %v171
    %174 = vst [vmem:[#allocation10] sm:$0xff] %v173
    // Predicated region
    $region30: #{tpu_custom_call.1} parent=1 // pred_check
      _
    $region31: #{tpu_custom_call.1} parent=1 // pred_check_branch
      %176 = sbr.rel (0) target = $region33
    $region32: #{tpu_custom_call.1} parent=1 // pred_region
      %s178 = ssub.s32 128, 128
      %179 = vsyncadd [#allocation7], %s178
      %s181 = sshll.u32 [#allocation10], 4
      %s182 = int_to_ptr.vmem [resolvable:$true] %s181
      %184 = dma.vmem_to_hbm [thread:$0]  %s182, 128, %s4, [#allocation7]
    $region33: #{tpu_custom_call.1} parent=1 // pred_fallthru
      _
    // Predicated region
    $region34: #{tpu_custom_call.1} parent=1 // pred_check
      _
    $region35: #{tpu_custom_call.1} parent=1 // pred_check_branch
      %186 = sbr.rel (0) target = $region37
    $region36: #{tpu_custom_call.1} parent=1 // pred_region
      %187 = dma.done [#allocation7], 128
    $region37: #{tpu_custom_call.1} parent=1 // pred_fallthru
      _
    %188 = vsyncpa [#allocation6], 1
    %189 = vsyncpa [#allocation9], 1
    %190 = vsyncpa [#allocation7], 1

</llo_original>
